<compile_context>
chip_gen: v5e
topology: v5e:2x2
jax: 0.10.0
libtpu: 0.0.40
codegen_flags: <defaults>
</compile_context>

<pallas_src>
import functools
from typing import NamedTuple, Optional

import jax
import jax.numpy as jnp
from jax.experimental import pallas as pl
from jax.experimental.pallas import tpu as pltpu


# Below this M*N*K the whole op is launch-overhead-bound -> skip Pallas.
_PALLAS_MIN_MNK = 128 * 128 * 128


def _round_up(x, m):
    return ((x + m - 1) // m) * m


def _m_align(dtype):
    """Minimum sublane multiple for the second-to-last dim at this dtype."""
    itemsize = jnp.dtype(dtype).itemsize
    if itemsize >= 4:
        return 8
    if itemsize == 2:
        return 16
    return 32


def _pick_tile(dim, cap, align):
    """Largest multiple of `align` that divides `dim` and is <= cap.

    `dim` is always a multiple of `align` (by construction), so `align`
    itself is a valid fallback -- no partial / masked blocks are ever
    generated.
    """
    best = align
    t = align
    limit = min(dim, cap)
    while t <= limit:
        if dim % t == 0:
            best = t
        t += align
    return best


class X2Proj(NamedTuple):
    """Precomputed x2_proj parameters (built once, reused every call)."""
    w_t: jax.Array    # [Kp, Cp] transposed weight, padded, MXU dtype
    b2: jax.Array     # [1, Cp]  bias, padded, f32
    in_dim: int       # original D_in
    out_dim: int      # original C


def make_x2_proj_params(w, b=None, mxu_dtype=jnp.bfloat16) -> X2Proj:
    """Precompute (once) the transposed/padded weight and padded 2-D bias.

    w: PyTorch nn.Linear weight [C, D_in]; b: optional [C].
    The weight is stored already padded to 128-aligned (Kp, Cp) in the MXU
    dtype, so the per-call path never touches it in HBM except to stream it
    into the kernel.
    """
    w = jnp.asarray(w, jnp.float32)
    C, D_in = w.shape
    Kp = _round_up(D_in, 128)
    Cp = _round_up(C, 128)
    w_t = jnp.pad(w.T, ((0, Kp - D_in), (0, Cp - C))).astype(mxu_dtype)
    if b is None:
        b_full = jnp.zeros((C,), jnp.float32)
    else:
        b_full = jnp.asarray(b, jnp.float32)
    b2 = jnp.pad(b_full, (0, Cp - C)).reshape(1, Cp)
    return X2Proj(w_t=w_t, b2=b2, in_dim=int(D_in), out_dim=int(C))


def _matmul_bias_kernel(x_ref, w_ref, b_ref, o_ref):
    """One (tm, tn) output tile, accumulated in-place over the K grid axis.

    x_ref: [tm, tk]   w_ref: [tk, tn]   b_ref: [1, tn]   o_ref: [tm, tn] f32
    The f32 output block is resident across k (out index_map ignores k), so
    it doubles as the accumulator: bias-init at k==0, accumulate every step.
    """
    @pl.when(pl.program_id(2) == 0)
    def _():
        o_ref[...] = jnp.broadcast_to(b_ref[...], o_ref.shape)

    o_ref[...] += jnp.dot(x_ref[...], w_ref[...],
                          preferred_element_type=jnp.float32)


@functools.partial(jax.jit, static_argnames=("tm", "tn", "tk"))
def _proj_matmul_pallas(x2, w_t, b2, *, tm, tn, tk):
    """Tiled x2 @ w_t + b2 on padded, aligned operands (output f32)."""
    Bp, Kp = x2.shape
    _, Cp = w_t.shape
    grid = (Bp // tm, Cp // tn, Kp // tk)

    in_item = jnp.dtype(x2.dtype).itemsize
    # Double-buffered input tiles + resident f32 output tile + bias tile.
    working_set = (2 * (tm * tk + tk * tn) * in_item
                   + 2 * tm * tn * 4 + 2 * tn * 4)
    vmem_limit = int(min(max(2 * working_set, 16 << 20), 48 << 20))

    return pl.pallas_call(
        _matmul_bias_kernel,
        out_shape=jax.ShapeDtypeStruct((Bp, Cp), jnp.float32),
        grid=grid,
        in_specs=[
            pl.BlockSpec((tm, tk), lambda i, j, k: (i, k)),
            pl.BlockSpec((tk, tn), lambda i, j, k: (k, j)),
            pl.BlockSpec((1, tn), lambda i, j, k: (0, j)),
        ],
        out_specs=pl.BlockSpec((tm, tn), lambda i, j, k: (i, j)),
        compiler_params=pltpu.CompilerParams(
            dimension_semantics=("parallel", "parallel", "arbitrary"),
            vmem_limit_bytes=vmem_limit),
    )(x2, w_t, b2)


def tile_x2_pallas(x2, proj: Optional[X2Proj] = None, *, force_pallas=False):
    """Equivalent of Fusion.tile_x2.

    x2  : [B, D_in].
    proj: optional precomputed X2Proj (from make_x2_proj_params).
    Returns [B, C, 1, 1] (or [B, D_in, 1, 1] when no projection is given).
    """
    if proj is None:
        # No x2_proj: just unsqueeze(-1).unsqueeze(-1).
        return x2[:, :, None, None]

    w_t, b2, D_in, C = proj
    B, D = x2.shape
    assert D == D_in, (D, D_in)
    mxu_dtype = w_t.dtype
    Kp, Cp = w_t.shape

    # Tiny problem: a pallas_call's fixed cost dwarfs a sub-vreg matmul.
    if not force_pallas and (B * D_in * C) < _PALLAS_MIN_MNK:
        out = jnp.dot(x2.astype(mxu_dtype), w_t[:D_in],
                      preferred_element_type=jnp.float32) + b2
        return out[:, :C][:, :, None, None]

    # Pad only x2 (weight/bias were padded once at param-build time).
    m_align = _m_align(mxu_dtype)
    Bp = _round_up(B, m_align)
    x2p = x2.astype(mxu_dtype)
    if (Bp, Kp) != (B, D_in):
        x2p = jnp.pad(x2p, ((0, Bp - B), (0, Kp - D_in)))

    # Tiles divide the 8/128-aligned dims exactly (no over-padding).
    tm = _pick_tile(Bp, 256, m_align)
    tn = _pick_tile(Cp, 512, 128)
    tk_cap = 2048 if jnp.dtype(mxu_dtype).itemsize <= 2 else 1024
    tk = _pick_tile(Kp, tk_cap, 128)
    # v7x has 2 TensorCores: make sure there are >=2 parallel (i,j) tiles
    # (keep tn >= 128 so the output store stays lane-dense).
    if (Bp // tm) * (Cp // tn) == 1 and tn % 256 == 0:
        tn //= 2

    out = _proj_matmul_pallas(x2p, w_t, b2, tm=tm, tn=tn, tk=tk)
    # Slice padding away, then unsqueeze(-1).unsqueeze(-1).
    return out[:B, :C][:, :, None, None]


class FusionPallas:
    """Base Fusion class (JAX/Pallas)."""

    def __init__(self, input_dim=3):
        self.input_dim = input_dim

    def tile_x2(self, x1, x2, x2_proj=None, *, force_pallas=False):
        # x2_proj, if given, is an X2Proj from make_x2_proj_params.
        return tile_x2_pallas(x2, x2_proj, force_pallas=force_pallas)

    def forward(self, x1, x2, x2_mask=None, x2_proj=None):
        # TODO(synk): base class forward raises NotImplementedError in PyTorch;
        # nothing to translate.
        raise NotImplementedError()


if __name__ == "__main__":
    key = jax.random.PRNGKey(0)
    keys = jax.random.split(key, 10)

    fusion = FusionPallas(input_dim=3)

    # ------- small shapes matching the module (B=2, C=4, H=W=16, D_in=32) ----
    B, C, H, W = 2, 4, 16, 16       # x1 feature map (NCHW), untouched by tile_x2
    D_in = 32                       # x2 hidden size

    x1 = jax.random.normal(keys[0], (B, C, H, W), jnp.float32)
    x2 = jax.random.normal(keys[1], (B, D_in), jnp.float32)
    w = jax.random.normal(keys[2], (C, D_in), jnp.float32) * 0.1   # [out, in]
    b = jax.random.normal(keys[3], (C,), jnp.float32) * 0.1

    # f32 params for the tiny shipped shapes -> tight numerical check.
    proj_f32 = make_x2_proj_params(w, b, mxu_dtype=jnp.float32)

    # Tiny shapes take the plain-jnp fast path (launch-overhead-bound on TPU).
    y_small = jax.block_until_ready(fusion.tile_x2(x1, x2, x2_proj=proj_f32))
    # Force the Pallas kernel on the same tiny shapes to exercise pad/slice.
    y_small_pl = jax.block_until_ready(
        fusion.tile_x2(x1, x2, x2_proj=proj_f32, force_pallas=True))
    # No projection: pure reshape glue.
    y_noproj = jax.block_until_ready(fusion.tile_x2(x1, x2))

    ref_small = (x2 @ w.T + b)[:, :, None, None]
    assert y_small.shape == (B, C, 1, 1)
    assert y_small_pl.shape == (B, C, 1, 1)
    assert y_noproj.shape == (B, D_in, 1, 1)
    assert jnp.allclose(y_small, ref_small, atol=1e-5, rtol=1e-5)
    assert jnp.allclose(y_small_pl, ref_small, atol=1e-3, rtol=1e-3)
    assert jnp.allclose(y_noproj, x2[:, :, None, None])

    # ------- larger shapes: tiled, pipelined Pallas matmul (default bf16) ----
    Bl, Dl, Cl = 128, 1024, 256
    x2l = jax.random.normal(keys[4], (Bl, Dl), jnp.float32)
    wl = jax.random.normal(keys[5], (Cl, Dl), jnp.float32) * 0.05
    bl = jax.random.normal(keys[6], (Cl,), jnp.float32) * 0.05
    projl = make_x2_proj_params(wl, bl)          # bf16 weight, padded once

    y_large = jax.block_until_ready(fusion.tile_x2(None, x2l, x2_proj=projl))
    ref_large = (jnp.dot(x2l, wl.T, precision=jax.lax.Precision.HIGHEST)
                 + bl)[:, :, None, None]
    assert y_large.shape == (Bl, Cl, 1, 1)
    assert jnp.allclose(y_large, ref_large, atol=5e-2, rtol=5e-2)

    # ------- awkward (non-aligned) shapes: exercises B/K/C padding + slicing -
    Ba, Da, Ca = 72, 200, 320
    x2a = jax.random.normal(keys[7], (Ba, Da), jnp.float32)
    wa = jax.random.normal(keys[8], (Ca, Da), jnp.float32) * 0.05
    ba = jax.random.normal(keys[9], (Ca,), jnp.float32) * 0.05
    proja = make_x2_proj_params(wa, ba)          # bf16, padded to (256, 384)

    y_awk = jax.block_until_ready(
        fusion.tile_x2(None, x2a, x2_proj=proja, force_pallas=True))
    ref_awk = (jnp.dot(x2a, wa.T, precision=jax.lax.Precision.HIGHEST)
               + ba)[:, :, None, None]
    assert y_awk.shape == (Ba, Ca, 1, 1)
    assert jnp.allclose(y_awk, ref_awk, atol=5e-2, rtol=5e-2)

    print("KERNEL_OK")
</pallas_src>

<mosaic_0001>
module attributes {stable_mosaic.version = 11 : i64} {
  func.func @_matmul_bias_kernel(%arg0: i32, %arg1: i32, %arg2: i32, %arg3: memref<8x128xf32, #tpu.memory_space<vmem>>, %arg4: memref<128x128xf32, #tpu.memory_space<vmem>>, %arg5: memref<1x128xf32, #tpu.memory_space<vmem>>, %arg6: memref<8x128xf32, #tpu.memory_space<vmem>>) attributes {dimension_semantics = [#tpu.dimension_semantics<parallel>, #tpu.dimension_semantics<parallel>, #tpu.dimension_semantics<arbitrary>], iteration_bounds = array<i64: 1, 1, 1>, scalar_prefetch = 0 : i64, scratch_operands = 0 : i64, tpu.core_type = #tpu.core_type<tc>, window_params = [{transform_indices = @transform_0, window_bounds = array<i64: 8, 128>}, {transform_indices = @transform_1, window_bounds = array<i64: 128, 128>}, {transform_indices = @transform_2, window_bounds = array<i64: 1, 128>}, {transform_indices = @transform_3, window_bounds = array<i64: 8, 128>}]} {
    %c0_i32 = arith.constant 0 : i32
    %0 = arith.cmpi eq, %arg2, %c0_i32 : i32
    %1 = arith.extui %0 : i1 to i32
    %c0_i32_0 = arith.constant 0 : i32
    %2 = arith.cmpi ne, %1, %c0_i32_0 : i32
    scf.if %2 {
      %c0_8 = arith.constant 0 : index
      %c0_9 = arith.constant 0 : index
      %9 = vector.load %arg5[%c0_8, %c0_9] : memref<1x128xf32, #tpu.memory_space<vmem>>, vector<1x128xf32>
      %10 = vector.shape_cast %9 : vector<1x128xf32> to vector<1x128xf32>
      %11 = vector.broadcast %10 : vector<1x128xf32> to vector<8x128xf32>
      %c0_10 = arith.constant 0 : index
      %c0_11 = arith.constant 0 : index
      %12 = vector.load %arg6[%c0_10, %c0_11] : memref<8x128xf32, #tpu.memory_space<vmem>>, vector<8x128xf32>
      tpu.vector_store %arg6[%c0_10, %c0_11], %11 {strides = array<i32>} : memref<8x128xf32, #tpu.memory_space<vmem>>, vector<8x128xf32>,
    } else {
    }
    %c0 = arith.constant 0 : index
    %c0_1 = arith.constant 0 : index
    %3 = vector.load %arg6[%c0, %c0_1] : memref<8x128xf32, #tpu.memory_space<vmem>>, vector<8x128xf32>
    %c0_2 = arith.constant 0 : index
    %c0_3 = arith.constant 0 : index
    %4 = vector.load %arg3[%c0_2, %c0_3] : memref<8x128xf32, #tpu.memory_space<vmem>>, vector<8x128xf32>
    %c0_4 = arith.constant 0 : index
    %c0_5 = arith.constant 0 : index
    %5 = vector.load %arg4[%c0_4, %c0_5] : memref<128x128xf32, #tpu.memory_space<vmem>>, vector<128x128xf32>
    %cst = arith.constant dense<0.000000e+00> : vector<8x128xf32>
    %6 = tpu.matmul %4, %5, %cst {dimension_numbers = #tpu.dot_dimension_numbers<[1], [0], [0], [1], [0, 0, 1, 1], [], []>} : vector<8x128xf32>, vector<128x128xf32>, vector<8x128xf32> -> vector<8x128xf32>
    %7 = arith.addf %3, %6 : vector<8x128xf32>
    %c0_6 = arith.constant 0 : index
    %c0_7 = arith.constant 0 : index
    %8 = vector.load %arg6[%c0_6, %c0_7] : memref<8x128xf32, #tpu.memory_space<vmem>>, vector<8x128xf32>
    tpu.vector_store %arg6[%c0_6, %c0_7], %7 {strides = array<i32>} : memref<8x128xf32, #tpu.memory_space<vmem>>, vector<8x128xf32>,
    return
  }
  func.func @transform_0(%arg0: i32, %arg1: i32, %arg2: i32) -> (i32, i32) {
    %c0_i32 = arith.constant 0 : i32
    return %arg0, %arg2 : i32, i32
  }
  func.func @transform_1(%arg0: i32, %arg1: i32, %arg2: i32) -> (i32, i32) {
    %c0_i32 = arith.constant 0 : i32
    return %arg2, %arg1 : i32, i32
  }
  func.func @transform_2(%arg0: i32, %arg1: i32, %arg2: i32) -> (i32, i32) {
    %c0_i32 = arith.constant 0 : i32
    %c0_i32_0 = arith.constant 0 : i32
    return %c0_i32, %arg1 : i32, i32
  }
  func.func @transform_3(%arg0: i32, %arg1: i32, %arg2: i32) -> (i32, i32) {
    %c0_i32 = arith.constant 0 : i32
    return %arg0, %arg1 : i32, i32
  }
}

</mosaic_0001>

<llo_original>
// kernel: _proj_matmul_pallas.1
$region0: #{_proj_matmul_pallas.1}
  #allocation0 [shape = 'u32[]', space=smem, size = 0x4, offset = 0x4, fixed_abs, tag = 'smem constant byte address 0x4 - core index']
  #allocation1 [shape = 'u32[72,128]{1,0:T(1,128)}', space=vmem, size = 0x9000, scoped, tag = 'internal scratch']
  %s0 = inlined_call_operand.hbm [shape: f32[8,128], index: 0, kind: input, shape index: {}]
  %s1 = inlined_call_operand.hbm [shape: f32[128,128], index: 1, kind: input, shape index: {}]
  %s2 = inlined_call_operand.vmem [shape: f32[1,128], index: 2, kind: input, shape index: {}]
  %s3 = inlined_call_operand.hbm [shape: f32[8,128], index: 3, kind: output, shape index: {}]
  %s4 = sld [smem:[#allocation0]]
  $region34: #{_proj_matmul_pallas.1} parent=0
    _
  %s6 = ssub.s32 1, %s4
  %s7 = scalar_select 0, %s6, %s4
  $region1: #{_proj_matmul_pallas.1} parent=0
    #allocation2 [shape = 'u8[4096]{0}', space=vmem, size = 0x1000, scoped, tag = 'input window, operand 0, single buffered']
    #allocation3 [shape = 's32[1]{0}', space=sflag, size = 0x4, scoped, tag = 'scoped memory for _proj_matmul_pallas.1']
    #allocation4 [shape = 's32[1]{0}', space=sflag, size = 0x4, scoped, tag = 'scoped memory for _proj_matmul_pallas.1']
    #allocation5 [shape = 'u8[65536]{0}', space=vmem, size = 0x10000, scoped, tag = 'input window, operand 1, single buffered']
    #allocation6 [shape = 's32[1]{0}', space=sflag, size = 0x4, scoped, tag = 'scoped memory for _proj_matmul_pallas.1']
    #allocation7 [shape = 'u8[4096]{0}', space=vmem, size = 0x1000, scoped, tag = 'output window, operand 0, single buffered']
    %8 = vsyncpa [#allocation3], 0
    %9 = vsyncpa [#allocation6], 0
    %10 = vsyncpa [#allocation4], 0
    // Predicated region
    $region2: #{_proj_matmul_pallas.1} parent=1 // pred_check
      _
    $region3: #{_proj_matmul_pallas.1} parent=1 // pred_check_branch
      %12 = sbr.rel (0) target = $region5
    $region4: #{_proj_matmul_pallas.1} parent=1 // pred_region
      %14 = vsyncadd [#allocation3], 0
      %s16 = sshll.u32 %s0, 4
      %s17 = int_to_ptr.hbm [resolvable:$true] %s16
      %s18 = sshll.u32 [#allocation2], 4
      %s19 = int_to_ptr.vmem [resolvable:$true] %s18
      %21 = dma.hbm_to_vmem [thread:$0]  %s17, 128, %s19, [#allocation3]
    $region5: #{_proj_matmul_pallas.1} parent=1 // pred_fallthru
      _
    // Predicated region
    $region6: #{_proj_matmul_pallas.1} parent=1 // pred_check
      _
    $region7: #{_proj_matmul_pallas.1} parent=1 // pred_check_branch
      %23 = sbr.rel (0) target = $region9
    $region8: #{_proj_matmul_pallas.1} parent=1 // pred_region
      %25 = vsyncadd [#allocation6], 0
      %s26 = sshll.u32 %s1, 4
      %s27 = int_to_ptr.hbm [resolvable:$true] %s26
      %s28 = sshll.u32 [#allocation5], 4
      %s29 = int_to_ptr.vmem [resolvable:$true] %s28
      %34 = dma.hbm_to_vmem [thread:$0]  %s27, 2048, %s29, [#allocation6], 128, 128, 8
    $region9: #{_proj_matmul_pallas.1} parent=1 // pred_fallthru
      _
    // Predicated region
    $region10: #{_proj_matmul_pallas.1} parent=1 // pred_check
      _
    $region11: #{_proj_matmul_pallas.1} parent=1 // pred_check_branch
      %36 = sbr.rel (0) target = $region13
    $region12: #{_proj_matmul_pallas.1} parent=1 // pred_region
      _
    $region13: #{_proj_matmul_pallas.1} parent=1 // pred_fallthru
      _
    // Predicated region
    $region14: #{_proj_matmul_pallas.1} parent=1 // pred_check
      _
    $region15: #{_proj_matmul_pallas.1} parent=1 // pred_check_branch
      %38 = sbr.rel (0) target = $region17
    $region16: #{_proj_matmul_pallas.1} parent=1 // pred_region
      %40 = dma.done [#allocation3], 128
    $region17: #{_proj_matmul_pallas.1} parent=1 // pred_fallthru
      _
    // Predicated region
    $region18: #{_proj_matmul_pallas.1} parent=1 // pred_check
      _
    $region19: #{_proj_matmul_pallas.1} parent=1 // pred_check_branch
      %42 = sbr.rel (0) target = $region21
    $region20: #{_proj_matmul_pallas.1} parent=1 // pred_region
      %44 = dma.done [#allocation6], 2048
    $region21: #{_proj_matmul_pallas.1} parent=1 // pred_fallthru
      _
    %p45 = scmp.eq.s32.totalorder 0, 0
    // Predicated region
    $region22: #{_proj_matmul_pallas.1} parent=1 // pred_check
      %p46 = pneg %p45
    $region23: #{_proj_matmul_pallas.1} parent=1 // pred_check_branch
      %48 = sbr.rel (%p46) target = $region25
    $region24: #{_proj_matmul_pallas.1} parent=1 // pred_region
      %v49 = vld [vmem:[%s2] sm:$0x1]
      %v51 = vperm.slane %v49, 0
      %53 = vst [vmem:[#allocation7] sm:$0xff] %v51
    $region25: #{_proj_matmul_pallas.1} parent=1 // pred_fallthru
      _
    %v54 = vld [vmem:[#allocation7] sm:$0xff]
    %v55 = vld [vmem:[#allocation2] sm:$0xff]
    %v56 = vld [vmem:[#allocation5] sm:$0xff]
    %v57 = vld [vmem:[#allocation5 + $0x8] sm:$0xff]
    %v58 = vld [vmem:[#allocation5 + $0x10] sm:$0xff]
    %v59 = vld [vmem:[#allocation5 + $0x18] sm:$0xff]
    %v60 = vld [vmem:[#allocation5 + $0x20] sm:$0xff]
    %v61 = vld [vmem:[#allocation5 + $0x28] sm:$0xff]
    %v62 = vld [vmem:[#allocation5 + $0x30] sm:$0xff]
    %v63 = vld [vmem:[#allocation5 + $0x38] sm:$0xff]
    %v64 = vld [vmem:[#allocation5 + $0x40] sm:$0xff]
    %v65 = vld [vmem:[#allocation5 + $0x48] sm:$0xff]
    %v66 = vld [vmem:[#allocation5 + $0x50] sm:$0xff]
    %v67 = vld [vmem:[#allocation5 + $0x58] sm:$0xff]
    %v68 = vld [vmem:[#allocation5 + $0x60] sm:$0xff]
    %v69 = vld [vmem:[#allocation5 + $0x68] sm:$0xff]
    %v70 = vld [vmem:[#allocation5 + $0x70] sm:$0xff]
    %v71 = vld [vmem:[#allocation5 + $0x78] sm:$0xff]
    %72 = vmatpush.msra.mxu0 %v71
    %73 = vmatpush.msra.mxu0 %v70
    %74 = vmatpush.msra.mxu0 %v69
    %75 = vmatpush.msra.mxu0 %v68
    %76 = vmatpush.msra.mxu0 %v67
    %77 = vmatpush.msra.mxu0 %v66
    %78 = vmatpush.msra.mxu0 %v65
    %79 = vmatpush.msra.mxu0 %v64
    %80 = vmatpush.msra.mxu0 %v63
    %81 = vmatpush.msra.mxu0 %v62
    %82 = vmatpush.msra.mxu0 %v61
    %83 = vmatpush.msra.mxu0 %v60
    %84 = vmatpush.msra.mxu0 %v59
    %85 = vmatpush.msra.mxu0 %v58
    %86 = vmatpush.msra.mxu0 %v57
    %87 = vmatpush.msra.mxu0 %v56
    %88 = vmatmul.f32.gmra.mxu0 %v55
    %v89 = vpop.f32.mrf.mxu0
    %v90 = vadd.f32 0.0, %v89
    %91 = vdwg.mxu0
    %v92 = vadd.f32 %v54, %v90
    %93 = vst [vmem:[#allocation7] sm:$0xff] %v92
    // Predicated region
    $region26: #{_proj_matmul_pallas.1} parent=1 // pred_check
      _
    $region27: #{_proj_matmul_pallas.1} parent=1 // pred_check_branch
      %95 = sbr.rel (0) target = $region29
    $region28: #{_proj_matmul_pallas.1} parent=1 // pred_region
      %97 = vsyncadd [#allocation4], 0
      %s99 = sshll.u32 [#allocation7], 4
      %s100 = int_to_ptr.vmem [resolvable:$true] %s99
      %s101 = sshll.u32 %s3, 4
      %s102 = int_to_ptr.hbm [resolvable:$true] %s101
      %104 = dma.vmem_to_hbm [thread:$0]  %s100, 128, %s102, [#allocation4]
    $region29: #{_proj_matmul_pallas.1} parent=1 // pred_fallthru
      _
    // Predicated region
    $region30: #{_proj_matmul_pallas.1} parent=1 // pred_check
      _
    $region31: #{_proj_matmul_pallas.1} parent=1 // pred_check_branch
      %106 = sbr.rel (0) target = $region33
    $region32: #{_proj_matmul_pallas.1} parent=1 // pred_region
      %108 = dma.done [#allocation4], 128
    $region33: #{_proj_matmul_pallas.1} parent=1 // pred_fallthru
      _
    %109 = vsyncpa [#allocation3], 1
    %110 = vsyncpa [#allocation6], 1
    %111 = vsyncpa [#allocation4], 1

</llo_original>
